<compile_context>
chip_gen: v6e
topology: v6e:2x2x1
jax: 0.10.0
libtpu: 0.0.40
codegen_flags: <defaults>
</compile_context>

<pallas_src>
import functools

import jax
import jax.numpy as jnp
from jax.experimental import pallas as pl
from jax.experimental.pallas import tpu as pltpu


def _scale_mul_kernel(row_tile, x_ref, s_ref, o_ref):
    # x_ref / o_ref: (row_tile, hw) tile of the activation.
    # s_ref: the FULL (rows, 1) per-channel scale, resident in VMEM (constant
    #        index_map => DMA'd once, not once per grid step).
    i = pl.program_id(0)
    start = pl.multiple_of(i * row_tile, row_tile)
    s = s_ref[pl.ds(start, row_tile), :]          # (row_tile, 1)
    o_ref[...] = x_ref[...] * s                   # lane-broadcast multiply


def _pick_row_tile(rows, hw, dtype_size):
    """Bytes-based row-tile selection for an HBM-bandwidth-bound streaming op."""
    min_rows = {4: 8, 2: 16, 1: 32}.get(dtype_size, 8)
    if rows <= min_rows:
        return rows
    # Divisors of `rows` that are multiples of the dtype's minimum sublane tile.
    cands = [d for d in range(min_rows, rows + 1, min_rows) if rows % d == 0]
    if not cands:
        return rows  # full-extent block (exempt from the (8,128) rule)

    bytes_per_row = hw * dtype_size
    target = 1 << 20       # ~1 MiB per x/out block (measured sweet spot)
    max_block = 4 << 20    # keep ~4x (double-buffered in+out) well in VMEM

    def score(rt):
        blk = rt * bytes_per_row
        steps = rows // rt
        size_pen = abs(blk - target)
        over_pen = 0 if blk <= max_block else 16 * (blk - max_block)
        # Prefer an even, >=2-step grid: megacore sharding on v7x, and keeps
        # input DMA / compute / writeback pipelined instead of serialized.
        par_pen = 0 if (steps >= 2 and steps % 2 == 0) else target // 2
        return size_pen + over_pen + par_pen

    return min(cands, key=score)


def broadcast_mul(x60, x65):
    """x60: (N, C, H, W), x65: (N, C, 1, 1) -> x60 * x65 (same as torch)."""
    N, C, H, W = x60.shape
    assert x65.shape == (N, C, 1, 1)

    rows, hw = N * C, H * W
    x2d = x60.reshape(rows, hw)      # channels on sublanes, spatial on lanes
    s2d = x65.reshape(rows, 1)

    dtype_size = jnp.dtype(x60.dtype).itemsize
    row_tile = _pick_row_tile(rows, hw, dtype_size)
    grid = (rows // row_tile,)

    out2d = pl.pallas_call(
        functools.partial(_scale_mul_kernel, row_tile),
        out_shape=jax.ShapeDtypeStruct((rows, hw), x60.dtype),
        grid_spec=pltpu.PrefetchScalarGridSpec(
            num_scalar_prefetch=0,
            grid=grid,
            in_specs=[
                pl.BlockSpec((row_tile, hw), lambda i: (i, 0)),
                # Constant index_map: whole (rows, 1) scale fetched once and
                # kept resident across all grid steps.
                pl.BlockSpec((rows, 1), lambda i: (0, 0)),
            ],
            out_specs=pl.BlockSpec((row_tile, hw), lambda i: (i, 0)),
        ),
        compiler_params=pltpu.CompilerParams(
            dimension_semantics=("parallel",),
        ),
    )(x2d, s2d)

    return out2d.reshape(N, C, H, W)


if __name__ == "__main__":
    key = jax.random.PRNGKey(0)
    k1, k2, k3, k4 = jax.random.split(key, 4)

    # Small shape consistent with the module's [N,C,H,W] * [N,C,1,1] semantics
    # (the original workload was [1,192,56,56] * [1,192,1,1]).
    N, C, H, W = 2, 4, 16, 16
    x60 = jax.random.normal(k1, (N, C, H, W), dtype=jnp.float32)
    x65 = jax.random.normal(k2, (N, C, 1, 1), dtype=jnp.float32)
    out = jax.block_until_ready(broadcast_mul(x60, x65))
    ref = x60 * x65
    assert out.shape == ref.shape
    assert jnp.allclose(out, ref, atol=1e-6, rtol=1e-6)

    # Second small case: multi-step grid + non-128-multiple lane width,
    # exercising the resident-scale dynamic-slice path.
    N, C, H, W = 1, 32, 10, 10
    xb = jax.random.normal(k3, (N, C, H, W), dtype=jnp.float32)
    sb = jax.random.normal(k4, (N, C, 1, 1), dtype=jnp.float32)
    outb = jax.block_until_ready(broadcast_mul(xb, sb))
    assert jnp.allclose(outb, xb * sb, atol=1e-6, rtol=1e-6)

    print("KERNEL_OK")
</pallas_src>

<mosaic_0001>
module attributes {stable_mosaic.version = 11 : i64} {
  func.func @_scale_mul_kernel(%arg0: i32, %arg1: memref<8x256xf32, #tpu.memory_space<vmem>>, %arg2: memref<8x1xf32, #tpu.memory_space<vmem>>, %arg3: memref<8x256xf32, #tpu.memory_space<vmem>>) attributes {dimension_semantics = [#tpu.dimension_semantics<parallel>], iteration_bounds = array<i64: 1>, scalar_prefetch = 0 : i64, scratch_operands = 0 : i64, tpu.core_type = #tpu.core_type<tc>, window_params = [{transform_indices = @transform_0, window_bounds = array<i64: 8, 256>}, {pipeline_mode = #tpu.pipeline_mode<synchronous>, transform_indices = @transform_1, window_bounds = array<i64: 8, 1>}, {transform_indices = @transform_2, window_bounds = array<i64: 8, 256>}]} {
    %c8_i32 = arith.constant 8 : i32
    %0 = arith.muli %arg0, %c8_i32 : i32
    %1 = tpu.assume_multiple %0, 8 : i32
    %2 = arith.index_cast %1 : i32 to index
    %c0 = arith.constant 0 : index
    %3 = vector.load %arg2[%2, %c0] : memref<8x1xf32, #tpu.memory_space<vmem>>, vector<8x1xf32>
    %c0_0 = arith.constant 0 : index
    %c0_1 = arith.constant 0 : index
    %4 = vector.load %arg1[%c0_0, %c0_1] : memref<8x256xf32, #tpu.memory_space<vmem>>, vector<8x256xf32>
    %5 = vector.broadcast %3 : vector<8x1xf32> to vector<8x256xf32>
    %6 = arith.mulf %4, %5 : vector<8x256xf32>
    %c0_2 = arith.constant 0 : index
    %c0_3 = arith.constant 0 : index
    %7 = vector.load %arg3[%c0_2, %c0_3] : memref<8x256xf32, #tpu.memory_space<vmem>>, vector<8x256xf32>
    tpu.vector_store %arg3[%c0_2, %c0_3], %6 {strides = array<i32>} : memref<8x256xf32, #tpu.memory_space<vmem>>, vector<8x256xf32>,
    return
  }
  func.func @transform_0(%arg0: i32) -> (i32, i32) {
    %c0_i32 = arith.constant 0 : i32
    %c0_i32_0 = arith.constant 0 : i32
    return %arg0, %c0_i32 : i32, i32
  }
  func.func @transform_1(%arg0: i32) -> (i32, i32) {
    %c0_i32 = arith.constant 0 : i32
    %c0_i32_0 = arith.constant 0 : i32
    %c0_i32_1 = arith.constant 0 : i32
    return %c0_i32, %c0_i32_0 : i32, i32
  }
  func.func @transform_2(%arg0: i32) -> (i32, i32) {
    %c0_i32 = arith.constant 0 : i32
    %c0_i32_0 = arith.constant 0 : i32
    return %arg0, %c0_i32 : i32, i32
  }
}

</mosaic_0001>

<llo_original>
// kernel: tpu_custom_call.1
$region0: #{tpu_custom_call.1}
  #allocation0 [shape = 'u32[]', space=smem, size = 0x4, offset = 0x4, fixed_abs, tag = 'smem constant byte address 0x4 - core index']
  #allocation1 [shape = 'u32[144,128]{1,0:T(1,128)}', space=vmem, size = 0x12000, scoped, tag = 'internal scratch']
  %s0 = inlined_call_operand.hbm [shape: f32[8,256], index: 0, kind: input, shape index: {}]
  %s1 = inlined_call_operand.vmem [shape: f32[8,1], index: 1, kind: input, shape index: {}]
  %s2 = inlined_call_operand.hbm [shape: f32[8,256], index: 2, kind: output, shape index: {}]
  %s3 = sld [smem:[#allocation0]]
  $region22: #{tpu_custom_call.1} parent=0
    _
  %s5 = ssub.s32 1, %s3
  %s6 = scalar_select 0, %s5, %s3
  $region1: #{tpu_custom_call.1} parent=0
    #allocation2 [shape = 'u8[8192]{0}', space=vmem, size = 0x2000, scoped, tag = 'input window, operand 0, single buffered']
    #allocation3 [shape = 's32[1]{0}', space=sflag, size = 0x4, scoped, tag = 'scoped memory for tpu_custom_call.1']
    #allocation4 [shape = 's32[1]{0}', space=sflag, size = 0x4, scoped, tag = 'scoped memory for tpu_custom_call.1']
    #allocation5 [shape = 'u8[8192]{0}', space=vmem, size = 0x2000, scoped, tag = 'output window, operand 0, single buffered']
    %7 = vsyncpa [#allocation3], 0
    %8 = vsyncpa [#allocation4], 0
    // Predicated region
    $region2: #{tpu_custom_call.1} parent=1 // pred_check
      _
    $region3: #{tpu_custom_call.1} parent=1 // pred_check_branch
      %10 = sbr.rel (0) target = $region5
    $region4: #{tpu_custom_call.1} parent=1 // pred_region
      %s12 = ssub.s32 256, 256
      %13 = vsyncadd [#allocation3], %s12
      %s15 = sshll.u32 [#allocation2], 4
      %s16 = int_to_ptr.vmem [resolvable:$true] %s15
      %18 = dma.hbm_to_vmem [thread:$0]  %s0, 256, %s16, [#allocation3]
    $region5: #{tpu_custom_call.1} parent=1 // pred_fallthru
      _
    // Predicated region
    $region6: #{tpu_custom_call.1} parent=1 // pred_check
      _
    $region7: #{tpu_custom_call.1} parent=1 // pred_check_branch
      %20 = sbr.rel (0) target = $region9
    $region8: #{tpu_custom_call.1} parent=1 // pred_region
      _
    $region9: #{tpu_custom_call.1} parent=1 // pred_fallthru
      _
    // Predicated region
    $region10: #{tpu_custom_call.1} parent=1 // pred_check
      _
    $region11: #{tpu_custom_call.1} parent=1 // pred_check_branch
      %22 = sbr.rel (0) target = $region13
    $region12: #{tpu_custom_call.1} parent=1 // pred_region
      %23 = dma.done [#allocation3], 256
    $region13: #{tpu_custom_call.1} parent=1 // pred_fallthru
      _
    %s24 = smul.u32 0, 8
    %s25 = scalar_lea.vmem %s1, %s24
    %v26 = vld [vmem:[%s25] sm:$0xff]
    %v27 = vld [vmem:[#allocation2] sm:$0xff]
    %v28 = vld [vmem:[#allocation2 + $0x8] sm:$0xff]
    %30 = vset.pattern.permute.xlu0 0
    %31 = vperm.xlu0 %30, %v26
    %v32 = vpop.permute.xlu0 %31
    %v34 = vmul.f32 %v27, %v32
    %v35 = vmul.f32 %v28, %v32
    %36 = vst [vmem:[#allocation5] sm:$0xff] %v34
    %37 = vst [vmem:[#allocation5 + $0x8] sm:$0xff] %v35
    // Predicated region
    $region14: #{tpu_custom_call.1} parent=1 // pred_check
      _
    $region15: #{tpu_custom_call.1} parent=1 // pred_check_branch
      %39 = sbr.rel (0) target = $region17
    $region16: #{tpu_custom_call.1} parent=1 // pred_region
      %s41 = ssub.s32 256, 256
      %42 = vsyncadd [#allocation4], %s41
      %s44 = sshll.u32 [#allocation5], 4
      %s45 = int_to_ptr.vmem [resolvable:$true] %s44
      %47 = dma.vmem_to_hbm [thread:$0]  %s45, 256, %s2, [#allocation4]
    $region17: #{tpu_custom_call.1} parent=1 // pred_fallthru
      _
    // Predicated region
    $region18: #{tpu_custom_call.1} parent=1 // pred_check
      _
    $region19: #{tpu_custom_call.1} parent=1 // pred_check_branch
      %49 = sbr.rel (0) target = $region21
    $region20: #{tpu_custom_call.1} parent=1 // pred_region
      %50 = dma.done [#allocation4], 256
    $region21: #{tpu_custom_call.1} parent=1 // pred_fallthru
      _
    %51 = vsyncpa [#allocation3], 1
    %52 = vsyncpa [#allocation4], 1

</llo_original>
